<compile_context>
chip_gen: v7x
topology: tpu7x:2x2x1
jax: 0.10.0
libtpu: 0.0.40
codegen_flags: <defaults>
</compile_context>

<pallas_src>
import math

import jax
import jax.numpy as jnp
from jax.experimental import pallas as pl
from jax.experimental.pallas import tpu as pltpu


def _round_up(x, m):
    return ((x + m - 1) // m) * m


def _pad2(a, rows, cols):
    r, c = a.shape
    if r == rows and c == cols:
        return a
    return jnp.pad(a, ((0, rows - r), (0, cols - c)))


def _nbytes(shape, dtype):
    n = 1
    for s in shape:
        n *= int(s)
    return n * jnp.dtype(dtype).itemsize


def _default_ntiles():
    """2 output tiles on v7x (2 TensorCores/chip), otherwise 1 (v5e/v6e)."""
    try:
        kind = jax.devices()[0].device_kind.lower()
    except Exception:
        return 1
    return 2 if ("v7" in kind or "7x" in kind) else 1


# --------------------------------------------------------------------- kernels

def _te_kernel(x_ref, w1_ref, b1_ref, w2_ref, b2_ref, o_ref):
    """One output N-tile of: linear_1 -> silu -> linear_2 (no condition)."""
    x = x_ref[...].astype(jnp.bfloat16)                          # cast in-kernel
    h = jnp.dot(x, w1_ref[...],
                preferred_element_type=jnp.float32) + b1_ref[...]
    h = h * jax.nn.sigmoid(h)                                    # SiLU in f32
    # TODO(synk): for time_embed_dim >= ~2560 the f32 h + bf16 copy would spill;
    # tile the second matmul's K in that regime (not needed at these sizes).
    o = jnp.dot(h.astype(jnp.bfloat16), w2_ref[...],
                preferred_element_type=jnp.float32) + b2_ref[...]
    o_ref[...] = o.astype(o_ref.dtype)


def _te_cond_kernel(x_ref, c_ref, wc_ref, w1_ref, b1_ref, w2_ref, b2_ref, o_ref):
    """One output N-tile of: x + cond_proj(c) -> linear_1 -> silu -> linear_2."""
    # cond add in f32; bf16 only at the MXU inputs.
    x = x_ref[...].astype(jnp.float32) + jnp.dot(
        c_ref[...].astype(jnp.bfloat16), wc_ref[...],
        preferred_element_type=jnp.float32)
    h = jnp.dot(x.astype(jnp.bfloat16), w1_ref[...],
                preferred_element_type=jnp.float32) + b1_ref[...]
    h = h * jax.nn.sigmoid(h)
    o = jnp.dot(h.astype(jnp.bfloat16), w2_ref[...],
                preferred_element_type=jnp.float32) + b2_ref[...]
    o_ref[...] = o.astype(o_ref.dtype)


# --------------------------------------------------------------------- wrapper

def prepare_params(w1, b1, w2, b2, wc=None, ntiles=None):
    """Pad once (at init) to lane-dense sizes; store matmul weights in bf16.

    w1: (Cin, D)  b1: (D,)  w2: (D, Dout)  b2: (Dout,)  wc: (Ccond, Cin) or None
    The contraction (K) dims are left unpadded (full-array blocks handle them);
    only the output (lane) dims D / Dout are padded to multiples of 128, with
    Dout padded to ntiles * tn so the grid has exactly `ntiles` steps.
    Zero padding is exact: padded columns contribute nothing to real outputs.
    """
    if ntiles is None:
        ntiles = _default_ntiles()
    cin, d = w1.shape
    d2, dout = w2.shape
    assert d2 == d
    dp = _round_up(d, 128)
    tn = _round_up(-(-dout // ntiles), 128)
    doutp = ntiles * tn
    p = {
        "w1": _pad2(jnp.asarray(w1), cin, dp).astype(jnp.bfloat16),
        "b1": _pad2(jnp.asarray(b1).reshape(1, -1), 1, dp).astype(jnp.float32),
        # TODO(synk): optional int8 + per-channel-scale storage for w2 would halve
        # the dominant HBM stream on v5e if the accuracy budget allows.
        "w2": _pad2(jnp.asarray(w2), dp, doutp).astype(jnp.bfloat16),
        "b2": _pad2(jnp.asarray(b2).reshape(1, -1), 1, doutp).astype(jnp.float32),
        "in_channels": cin,
        "out_dim": dout,
        "ntiles": ntiles,
    }
    if wc is not None:
        p["wc"] = jnp.asarray(wc).astype(jnp.bfloat16)
        p["cond_dim"] = wc.shape[0]
    return p


def timestep_embedding(sample, params, condition=None):
    """Pallas-fused TimestepEmbedding forward.

    sample:    (B, in_channels) float32
    condition: optional (B, cond_proj_dim) float32
    params:    output of prepare_params()/init_params()
    """
    B, cin = sample.shape
    assert cin == params["in_channels"]
    out_dtype = sample.dtype
    dp = params["w1"].shape[1]
    doutp = params["w2"].shape[1]
    out_dim = params["out_dim"]
    ntiles = params["ntiles"]
    tn = doutp // ntiles

    invariant = lambda j: (0, 0)   # grid-invariant: DMA'd once per core, resident
    tiled = lambda j: (0, j)

    in_specs = [pl.BlockSpec((B, cin), invariant)]
    args = [sample]
    invariant_bytes = _nbytes((B, cin), sample.dtype)
    flops_per_tile = 2 * B * (cin * dp + dp * tn)

    if condition is not None:
        ccond = params["cond_dim"]
        in_specs += [pl.BlockSpec((B, ccond), invariant),
                     pl.BlockSpec((ccond, cin), invariant)]
        args += [condition, params["wc"]]
        invariant_bytes += (_nbytes((B, ccond), condition.dtype) +
                            _nbytes((ccond, cin), jnp.bfloat16))
        flops_per_tile += 2 * B * ccond * cin
        kernel = _te_cond_kernel
    else:
        kernel = _te_kernel

    in_specs += [pl.BlockSpec((cin, dp), invariant),
                 pl.BlockSpec((1, dp), invariant),
                 pl.BlockSpec((dp, tn), tiled),
                 pl.BlockSpec((1, tn), tiled)]
    args += [params["w1"], params["b1"], params["w2"], params["b2"]]
    invariant_bytes += _nbytes((cin, dp), jnp.bfloat16) + _nbytes((1, dp), jnp.float32)

    out_specs = pl.BlockSpec((B, tn), tiled)
    out_shape = jax.ShapeDtypeStruct((B, doutp), out_dtype)

    # VMEM: invariant blocks are single-buffered, only tiled blocks double-buffer.
    tiled_bytes = (_nbytes((dp, tn), jnp.bfloat16) + _nbytes((1, tn), jnp.float32) +
                   _nbytes((B, tn), out_dtype))
    vmem_limit = int(min(max(invariant_bytes + 2 * tiled_bytes + (4 << 20),
                             16 << 20), 40 << 20))

    # Advisory cost: per-tile recompute counted ntiles times; invariant blocks are
    # DMA'd once per core (== once per tile for ntiles in {1, 2}).
    flops = ntiles * flops_per_tile
    bytes_accessed = (ntiles * invariant_bytes
                      + _nbytes((dp, doutp), jnp.bfloat16)
                      + _nbytes((1, doutp), jnp.float32)
                      + _nbytes((B, doutp), out_dtype))
    cost = pl.CostEstimate(flops=int(flops),
                           transcendentals=int(ntiles * B * dp),
                           bytes_accessed=int(bytes_accessed))

    out = pl.pallas_call(
        kernel,
        out_shape=out_shape,
        grid_spec=pltpu.PrefetchScalarGridSpec(
            num_scalar_prefetch=0,
            grid=(ntiles,),
            in_specs=in_specs,
            out_specs=out_specs,
        ),
        compiler_params=pltpu.CompilerParams(
            dimension_semantics=("parallel",),   # one N-tile per TensorCore on v7x
            vmem_limit_bytes=vmem_limit,
        ),
        cost_estimate=cost,
    )(*args)

    if doutp == out_dim:
        return out                               # no trailing slice copy
    return out[:, :out_dim]


# -------------------------------------------------------------- init/reference

def init_params(key, in_channels, time_embed_dim, out_dim=None, cond_proj_dim=None):
    """PyTorch nn.Linear-like init (uniform +-1/sqrt(fan_in)), padded/cast once."""
    if out_dim is None:
        out_dim = time_embed_dim
    k1, k2, k3, k4, k5 = jax.random.split(key, 5)

    def lin(kw, kb, fan_in, fan_out):
        bound = 1.0 / math.sqrt(fan_in)
        w = jax.random.uniform(kw, (fan_in, fan_out), jnp.float32, -bound, bound)
        b = jax.random.uniform(kb, (fan_out,), jnp.float32, -bound, bound)
        return w, b

    w1, b1 = lin(k1, k2, in_channels, time_embed_dim)
    w2, b2 = lin(k3, k4, time_embed_dim, out_dim)
    wc = None
    if cond_proj_dim is not None:
        bound = 1.0 / math.sqrt(cond_proj_dim)
        wc = jax.random.uniform(k5, (cond_proj_dim, in_channels),
                                jnp.float32, -bound, bound)
    return prepare_params(w1, b1, w2, b2, wc)


def _reference(sample, params, condition=None):
    """Pure-JAX reference with the same dtype policy as the kernel."""
    cin = params["in_channels"]
    x = sample.astype(jnp.float32)
    if condition is not None:
        x = x + jnp.dot(condition.astype(jnp.bfloat16), params["wc"],
                        preferred_element_type=jnp.float32)
    h = jnp.dot(x.astype(jnp.bfloat16), params["w1"],
                preferred_element_type=jnp.float32) + params["b1"]
    h = h * jax.nn.sigmoid(h)
    o = jnp.dot(h.astype(jnp.bfloat16), params["w2"],
                preferred_element_type=jnp.float32) + params["b2"]
    return o[:, : params["out_dim"]].astype(sample.dtype)


if __name__ == "__main__":
    B, in_channels, time_embed_dim, out_dim, cond_proj_dim = 8, 32, 128, 128, 16

    key = jax.random.PRNGKey(0)
    kx, kc, kp = jax.random.split(key, 3)
    sample = jax.random.normal(kx, (B, in_channels), jnp.float32)
    condition = jax.random.normal(kc, (B, cond_proj_dim), jnp.float32)
    params = init_params(kp, in_channels, time_embed_dim, out_dim, cond_proj_dim)

    # Default config path (condition=None, act='silu', post_act=None)
    out = jax.block_until_ready(timestep_embedding(sample, params))
    ref = _reference(sample, params)
    assert out.shape == (B, out_dim)
    assert jnp.allclose(out, ref, atol=2e-2, rtol=2e-2), "mismatch (no cond)"

    # Optional cond_proj path
    out_c = jax.block_until_ready(timestep_embedding(sample, params, condition))
    ref_c = _reference(sample, params, condition)
    assert out_c.shape == (B, out_dim)
    assert jnp.allclose(out_c, ref_c, atol=2e-2, rtol=2e-2), "mismatch (cond)"

    # TODO(synk): non-default act_fn / post_act_fn variants are not wired into the
    # fused kernel (module defaults: act='silu', post_act=None).
    print("KERNEL_OK")
</pallas_src>

<mosaic_0001>
module attributes {stable_mosaic.version = 11 : i64} {
  func.func @_te_kernel(%arg0: i32, %arg1: memref<8x32xf32, #tpu.memory_space<vmem>>, %arg2: memref<32x128xbf16, #tpu.memory_space<vmem>>, %arg3: memref<1x128xf32, #tpu.memory_space<vmem>>, %arg4: memref<128x128xbf16, #tpu.memory_space<vmem>>, %arg5: memref<1x128xf32, #tpu.memory_space<vmem>>, %arg6: memref<8x128xf32, #tpu.memory_space<vmem>>) attributes {dimension_semantics = [#tpu.dimension_semantics<parallel>], iteration_bounds = array<i64: 1>, scalar_prefetch = 0 : i64, scratch_operands = 0 : i64, tpu.core_type = #tpu.core_type<tc>, window_params = [{pipeline_mode = #tpu.pipeline_mode<synchronous>, transform_indices = @transform_0, window_bounds = array<i64: 8, 32>}, {pipeline_mode = #tpu.pipeline_mode<synchronous>, transform_indices = @transform_1, window_bounds = array<i64: 32, 128>}, {pipeline_mode = #tpu.pipeline_mode<synchronous>, transform_indices = @transform_2, window_bounds = array<i64: 1, 128>}, {transform_indices = @transform_3, window_bounds = array<i64: 128, 128>}, {transform_indices = @transform_4, window_bounds = array<i64: 1, 128>}, {transform_indices = @transform_5, window_bounds = array<i64: 8, 128>}]} {
    %c0 = arith.constant 0 : index
    %c0_0 = arith.constant 0 : index
    %0 = vector.load %arg1[%c0, %c0_0] : memref<8x32xf32, #tpu.memory_space<vmem>>, vector<8x32xf32>
    %1 = arith.truncf %0 : vector<8x32xf32> to vector<8x32xbf16>
    %c0_1 = arith.constant 0 : index
    %c0_2 = arith.constant 0 : index
    %2 = vector.load %arg2[%c0_1, %c0_2] : memref<32x128xbf16, #tpu.memory_space<vmem>>, vector<32x128xbf16>
    %cst = arith.constant dense<0.000000e+00> : vector<8x128xf32>
    %3 = tpu.matmul %1, %2, %cst {dimension_numbers = #tpu.dot_dimension_numbers<[1], [0], [0], [1], [0, 0, 1, 1], [], []>} : vector<8x32xbf16>, vector<32x128xbf16>, vector<8x128xf32> -> vector<8x128xf32>
    %c0_3 = arith.constant 0 : index
    %c0_4 = arith.constant 0 : index
    %4 = vector.load %arg3[%c0_3, %c0_4] : memref<1x128xf32, #tpu.memory_space<vmem>>, vector<1x128xf32>
    %5 = vector.broadcast %4 : vector<1x128xf32> to vector<8x128xf32>
    %6 = arith.addf %3, %5 : vector<8x128xf32>
    %7 = arith.negf %6 : vector<8x128xf32>
    %8 = math.exp %7 : vector<8x128xf32>
    %cst_5 = arith.constant 1.000000e+00 : f32
    %9 = vector.broadcast %cst_5 : f32 to vector<8x128xf32>
    %10 = arith.addf %9, %8 : vector<8x128xf32>
    %11 = arith.divf %9, %10 : vector<8x128xf32>
    %12 = arith.mulf %6, %11 : vector<8x128xf32>
    %13 = arith.truncf %12 : vector<8x128xf32> to vector<8x128xbf16>
    %c0_6 = arith.constant 0 : index
    %c0_7 = arith.constant 0 : index
    %14 = vector.load %arg4[%c0_6, %c0_7] : memref<128x128xbf16, #tpu.memory_space<vmem>>, vector<128x128xbf16>
    %cst_8 = arith.constant dense<0.000000e+00> : vector<8x128xf32>
    %15 = tpu.matmul %13, %14, %cst_8 {dimension_numbers = #tpu.dot_dimension_numbers<[1], [0], [0], [1], [0, 0, 1, 1], [], []>} : vector<8x128xbf16>, vector<128x128xbf16>, vector<8x128xf32> -> vector<8x128xf32>
    %c0_9 = arith.constant 0 : index
    %c0_10 = arith.constant 0 : index
    %16 = vector.load %arg5[%c0_9, %c0_10] : memref<1x128xf32, #tpu.memory_space<vmem>>, vector<1x128xf32>
    %17 = vector.broadcast %16 : vector<1x128xf32> to vector<8x128xf32>
    %18 = arith.addf %15, %17 : vector<8x128xf32>
    %c0_11 = arith.constant 0 : index
    %c0_12 = arith.constant 0 : index
    %19 = vector.load %arg6[%c0_11, %c0_12] : memref<8x128xf32, #tpu.memory_space<vmem>>, vector<8x128xf32>
    tpu.vector_store %arg6[%c0_11, %c0_12], %18 {strides = array<i32>} : memref<8x128xf32, #tpu.memory_space<vmem>>, vector<8x128xf32>,
    return
  }
  func.func @transform_0(%arg0: i32) -> (i32, i32) {
    %c0_i32 = arith.constant 0 : i32
    %c0_i32_0 = arith.constant 0 : i32
    %c0_i32_1 = arith.constant 0 : i32
    return %c0_i32, %c0_i32_0 : i32, i32
  }
  func.func @transform_1(%arg0: i32) -> (i32, i32) {
    %c0_i32 = arith.constant 0 : i32
    %c0_i32_0 = arith.constant 0 : i32
    %c0_i32_1 = arith.constant 0 : i32
    return %c0_i32, %c0_i32_0 : i32, i32
  }
  func.func @transform_2(%arg0: i32) -> (i32, i32) {
    %c0_i32 = arith.constant 0 : i32
    %c0_i32_0 = arith.constant 0 : i32
    %c0_i32_1 = arith.constant 0 : i32
    return %c0_i32, %c0_i32_0 : i32, i32
  }
  func.func @transform_3(%arg0: i32) -> (i32, i32) {
    %c0_i32 = arith.constant 0 : i32
    %c0_i32_0 = arith.constant 0 : i32
    return %c0_i32, %arg0 : i32, i32
  }
  func.func @transform_4(%arg0: i32) -> (i32, i32) {
    %c0_i32 = arith.constant 0 : i32
    %c0_i32_0 = arith.constant 0 : i32
    return %c0_i32, %arg0 : i32, i32
  }
  func.func @transform_5(%arg0: i32) -> (i32, i32) {
    %c0_i32 = arith.constant 0 : i32
    %c0_i32_0 = arith.constant 0 : i32
    return %c0_i32, %arg0 : i32, i32
  }
}

</mosaic_0001>

<llo_original>
// kernel: tpu_custom_call.1
$region0: #{tpu_custom_call.1}
  #allocation0 [shape = 'u32[]', space=smem, size = 0x4, offset = 0x4, fixed_abs, tag = 'smem constant byte address 0x4 - core index']
  #allocation1 [shape = 'u32[144,128]{1,0:T(1,128)}', space=vmem, size = 0x12000, scoped, tag = 'internal scratch']
  %s0 = inlined_call_operand.hbm [shape: f32[8,32], index: 0, kind: input, shape index: {}]
  %s1 = inlined_call_operand.hbm [shape: bf16[32,128], index: 1, kind: input, shape index: {}]
  %s2 = inlined_call_operand.vmem [shape: f32[1,128], index: 2, kind: input, shape index: {}]
  %s3 = inlined_call_operand.hbm [shape: bf16[128,128], index: 3, kind: input, shape index: {}]
  %s4 = inlined_call_operand.vmem [shape: f32[1,128], index: 4, kind: input, shape index: {}]
  %s5 = inlined_call_operand.hbm [shape: f32[8,128], index: 5, kind: output, shape index: {}]
  %s6 = sld [smem:[#allocation0]]
  $region42: #{tpu_custom_call.1} parent=0
    _
  %s8 = ssub.s32 1, %s6
  %s9 = scalar_select 0, %s8, %s6
  $region1: #{tpu_custom_call.1} parent=0
    #allocation2 [shape = 'u8[4096]{0}', space=vmem, size = 0x1000, scoped, tag = 'input window, operand 0, single buffered']
    #allocation3 [shape = 's32[1]{0}', space=sflag, size = 0x4, scoped, tag = 'scoped memory for tpu_custom_call.1']
    #allocation4 [shape = 's32[1]{0}', space=sflag, size = 0x4, scoped, tag = 'scoped memory for tpu_custom_call.1']
    #allocation5 [shape = 'u8[8192]{0}', space=vmem, size = 0x2000, scoped, tag = 'input window, operand 1, single buffered']
    #allocation6 [shape = 's32[1]{0}', space=sflag, size = 0x4, scoped, tag = 'scoped memory for tpu_custom_call.1']
    #allocation7 [shape = 'u8[32768]{0}', space=vmem, size = 0x8000, scoped, tag = 'input window, operand 3, single buffered']
    #allocation8 [shape = 'u8[4096]{0}', space=vmem, size = 0x1000, scoped, tag = 'output window, operand 0, single buffered']
    %10 = vsyncpa [#allocation3], 0
    %11 = vsyncpa [#allocation6], 0
    %12 = vsyncpa [#allocation4], 0
    // Predicated region
    $region2: #{tpu_custom_call.1} parent=1 // pred_check
      _
    $region3: #{tpu_custom_call.1} parent=1 // pred_check_branch
      %14 = sbr.rel (0) target = $region5
    $region4: #{tpu_custom_call.1} parent=1 // pred_region
      %s16 = ssub.s32 128, 128
      %17 = vsyncadd [#allocation3], %s16
      %s19 = sshll.u32 [#allocation2], 4
      %s20 = int_to_ptr.vmem [resolvable:$true] %s19
      %22 = dma.hbm_to_vmem [thread:$0]  %s0, 128, %s20, [#allocation3]
    $region5: #{tpu_custom_call.1} parent=1 // pred_fallthru
      _
    // Predicated region
    $region6: #{tpu_custom_call.1} parent=1 // pred_check
      _
    $region7: #{tpu_custom_call.1} parent=1 // pred_check_branch
      %24 = sbr.rel (0) target = $region9
    $region8: #{tpu_custom_call.1} parent=1 // pred_region
      %s26 = ssub.s32 256, 256
      %27 = vsyncadd [#allocation6], %s26
      %s28 = sshll.u32 [#allocation5], 4
      %s29 = int_to_ptr.vmem [resolvable:$true] %s28
      %34 = dma.hbm_to_vmem [thread:$0]  %s1, 256, %s29, [#allocation6], 64, 64, 4
    $region9: #{tpu_custom_call.1} parent=1 // pred_fallthru
      _
    // Predicated region
    $region10: #{tpu_custom_call.1} parent=1 // pred_check
      _
    $region11: #{tpu_custom_call.1} parent=1 // pred_check_branch
      %36 = sbr.rel (0) target = $region13
    $region12: #{tpu_custom_call.1} parent=1 // pred_region
      _
    $region13: #{tpu_custom_call.1} parent=1 // pred_fallthru
      _
    // Predicated region
    $region14: #{tpu_custom_call.1} parent=1 // pred_check
      _
    $region15: #{tpu_custom_call.1} parent=1 // pred_check_branch
      %38 = sbr.rel (0) target = $region17
    $region16: #{tpu_custom_call.1} parent=1 // pred_region
      %s40 = ssub.s32 1024, 1024
      %41 = vsyncadd [#allocation6], %s40
      %s42 = sshll.u32 [#allocation7], 4
      %s43 = int_to_ptr.vmem [resolvable:$true] %s42
      %48 = dma.hbm_to_vmem [thread:$0]  %s3, 1024, %s43, [#allocation6], 64, 64, 4
    $region17: #{tpu_custom_call.1} parent=1 // pred_fallthru
      _
    // Predicated region
    $region18: #{tpu_custom_call.1} parent=1 // pred_check
      _
    $region19: #{tpu_custom_call.1} parent=1 // pred_check_branch
      %50 = sbr.rel (0) target = $region21
    $region20: #{tpu_custom_call.1} parent=1 // pred_region
      _
    $region21: #{tpu_custom_call.1} parent=1 // pred_fallthru
      _
    // Predicated region
    $region22: #{tpu_custom_call.1} parent=1 // pred_check
      _
    $region23: #{tpu_custom_call.1} parent=1 // pred_check_branch
      %52 = sbr.rel (0) target = $region25
    $region24: #{tpu_custom_call.1} parent=1 // pred_region
      %53 = dma.done [#allocation3], 128
    $region25: #{tpu_custom_call.1} parent=1 // pred_fallthru
      _
    // Predicated region
    $region26: #{tpu_custom_call.1} parent=1 // pred_check
      _
    $region27: #{tpu_custom_call.1} parent=1 // pred_check_branch
      %55 = sbr.rel (0) target = $region29
    $region28: #{tpu_custom_call.1} parent=1 // pred_region
      %56 = dma.done [#allocation6], 256
    $region29: #{tpu_custom_call.1} parent=1 // pred_fallthru
      _
    // Predicated region
    $region30: #{tpu_custom_call.1} parent=1 // pred_check
      _
    $region31: #{tpu_custom_call.1} parent=1 // pred_check_branch
      %58 = sbr.rel (0) target = $region33
    $region32: #{tpu_custom_call.1} parent=1 // pred_region
      %59 = dma.done [#allocation6], 1024
    $region33: #{tpu_custom_call.1} parent=1 // pred_fallthru
      _
    %v61 = vld [vmem:[#allocation2] sm:$0xff]
    %v62 = vpack.c.bf16 %v61, %v61
    %v63 = vld [vmem:[#allocation5] sm:$0xf]
    %v64 = vld [vmem:[#allocation5 + $0x4] sm:$0xf]
    %v65 = vld [vmem:[#allocation5 + $0x8] sm:$0xf]
    %v66 = vld [vmem:[#allocation5 + $0xc] sm:$0xf]
    %v67 = vld [vmem:[%s2] sm:$0x1]
    %v69 = vlaneseq
    %v70 = vshrl.u32 %v69, 7
    %v71 = vsub.s32 0, %v70
    %v72 = vrot.slane %v67, %v71
    %v78 = vunpack.c.l.b16 %v63
    %v79 = vunpack.c.l.b16 %v64
    %v80 = vunpack.c.l.b16 %v65
    %v81 = vunpack.c.l.b16 %v66
    %v82 = vpack.c.b16 %v79, %v78
    %v83 = vpack.c.b16 %v81, %v80
    %vm86 = vcmask 261120
    %v88 = vsel %vm86, %v62, 0
    %90 = vmatprep.subr.bf16.mxu0 0
    %91 = vmatpush1.bf16.msra.mxu0 %v82
    %92 = vmatprep.subr.bf16.mxu0 0
    %93 = vmatpush1.bf16.msra.mxu0 %v83
    %94 = vmatprep.subr.bf16.mxu0 0
    %95 = vmatpush1.bf16.msra.mxu0 0
    %96 = vmatprep.subr.bf16.mxu0 0
    %97 = vmatpush1.bf16.msra.mxu0 0
    %98 = vmatprep.subr.bf16.mxu0 0
    %99 = vmatpush1.bf16.msra.mxu0 0
    %100 = vmatprep.subr.bf16.mxu0 0
    %101 = vmatpush1.bf16.msra.mxu0 0
    %102 = vmatprep.subr.bf16.mxu0 0
    %103 = vmatpush1.bf16.msra.mxu0 0
    %104 = vmatprep.subr.bf16.mxu0 0
    %105 = vmatpush1.bf16.msra.mxu0 0
    %106 = vmatprep.subr.bf16.mxu0 0
    %107 = vmatpush1.bf16.msra.mxu0 0
    %108 = vmatprep.subr.bf16.mxu0 0
    %109 = vmatpush1.bf16.msra.mxu0 0
    %110 = vmatprep.subr.bf16.mxu0 0
    %111 = vmatpush1.bf16.msra.mxu0 0
    %112 = vmatprep.subr.bf16.mxu0 0
    %113 = vmatpush1.bf16.msra.mxu0 0
    %114 = vmatprep.subr.bf16.mxu0 0
    %115 = vmatpush1.bf16.msra.mxu0 0
    %116 = vmatprep.subr.bf16.mxu0 0
    %117 = vmatpush1.bf16.msra.mxu0 0
    %118 = vmatprep.subr.bf16.mxu0 0
    %119 = vmatpush1.bf16.msra.mxu0 0
    %120 = vmatprep.subr.bf16.mxu0 0
    %121 = vmatpush1.bf16.msra.mxu0 0
    %122 = vmatprep.mubr.bf16.mxu0 0
    %123 = vmatmul.mubr.bf16.gmra.mrb[0].mxu0 %v88
    %v124 = vpop.f32.mrb[0].mxu0
    %v125 = vadd.f32 %v72, %v124
    %v126 = vpop.f32.mrb[0].mxu0
    %v127 = vpop.f32.mrb[0].mxu0
    %v128 = vpop.f32.mrb[0].mxu0
    %129 = vdwg.mxu0
    %v130 = vxor.u32 %v125, 2147483648
    %v131 = vmul.f32 %v130, 1.442695
    %v132 = vpow.pop %v131
    %v133 = vadd.f32 %v132, 1.0
    %v134 = vrcp.pop %v133
    %v135 = vmul.f32 1.0, %v134
    %v136 = vmul.f32 %v125, %v135
    %v137 = vpack.c.bf16 %v136, %v136
    %v138 = vld [vmem:[#allocation7] sm:$0xf]
    %v139 = vld [vmem:[#allocation7 + $0x4] sm:$0xf]
    %v140 = vld [vmem:[#allocation7 + $0x8] sm:$0xf]
    %v141 = vld [vmem:[#allocation7 + $0xc] sm:$0xf]
    %v142 = vld [vmem:[#allocation7 + $0x10] sm:$0xf]
    %v143 = vld [vmem:[#allocation7 + $0x14] sm:$0xf]
    %v144 = vld [vmem:[#allocation7 + $0x18] sm:$0xf]
    %v145 = vld [vmem:[#allocation7 + $0x1c] sm:$0xf]
    %v146 = vld [vmem:[#allocation7 + $0x20] sm:$0xf]
    %v147 = vld [vmem:[#allocation7 + $0x24] sm:$0xf]
    %v148 = vld [vmem:[#allocation7 + $0x28] sm:$0xf]
    %v149 = vld [vmem:[#allocation7 + $0x2c] sm:$0xf]
    %v150 = vld [vmem:[#allocation7 + $0x30] sm:$0xf]
    %v151 = vld [vmem:[#allocation7 + $0x34] sm:$0xf]
    %v152 = vld [vmem:[#allocation7 + $0x38] sm:$0xf]
    %v153 = vld [vmem:[#allocation7 + $0x3c] sm:$0xf]
    %v154 = vld [vmem:[%s4] sm:$0x1]
    %v156 = vlaneseq
    %v157 = vshrl.u32 %v156, 7
    %v158 = vsub.s32 0, %v157
    %v159 = vrot.slane %v154, %v158
    %v177 = vunpack.c.l.b16 %v138
    %v178 = vunpack.c.l.b16 %v139
    %v179 = vunpack.c.l.b16 %v140
    %v180 = vunpack.c.l.b16 %v141
    %v181 = vunpack.c.l.b16 %v142
    %v182 = vunpack.c.l.b16 %v143
    %v183 = vunpack.c.l.b16 %v144
    %v184 = vunpack.c.l.b16 %v145
    %v185 = vunpack.c.l.b16 %v146
    %v186 = vunpack.c.l.b16 %v147
    %v187 = vunpack.c.l.b16 %v148
    %v188 = vunpack.c.l.b16 %v149
    %v189 = vunpack.c.l.b16 %v150
    %v190 = vunpack.c.l.b16 %v151
    %v191 = vunpack.c.l.b16 %v152
    %v192 = vunpack.c.l.b16 %v153
    %v193 = vpack.c.b16 %v178, %v177
    %v194 = vpack.c.b16 %v180, %v179
    %v195 = vpack.c.b16 %v182, %v181
    %v196 = vpack.c.b16 %v184, %v183
    %v197 = vpack.c.b16 %v186, %v185
    %v198 = vpack.c.b16 %v188, %v187
    %v199 = vpack.c.b16 %v190, %v189
    %v200 = vpack.c.b16 %v192, %v191
    %209 = vmatprep.subr.bf16.mxu0 0
    %210 = vmatpush1.bf16.msra.mxu0 %v193
    %211 = vmatprep.subr.bf16.mxu0 0
    %212 = vmatpush1.bf16.msra.mxu0 %v194
    %213 = vmatprep.subr.bf16.mxu0 0
    %214 = vmatpush1.bf16.msra.mxu0 %v195
    %215 = vmatprep.subr.bf16.mxu0 0
    %216 = vmatpush1.bf16.msra.mxu0 %v196
    %217 = vmatprep.subr.bf16.mxu0 0
    %218 = vmatpush1.bf16.msra.mxu0 %v197
    %219 = vmatprep.subr.bf16.mxu0 0
    %220 = vmatpush1.bf16.msra.mxu0 %v198
    %221 = vmatprep.subr.bf16.mxu0 0
    %222 = vmatpush1.bf16.msra.mxu0 %v199
    %223 = vmatprep.subr.bf16.mxu0 0
    %224 = vmatpush1.bf16.msra.mxu0 %v200
    %225 = vmatprep.subr.bf16.mxu0 0
    %226 = vmatpush1.bf16.msra.mxu0 0
    %227 = vmatprep.subr.bf16.mxu0 0
    %228 = vmatpush1.bf16.msra.mxu0 0
    %229 = vmatprep.subr.bf16.mxu0 0
    %230 = vmatpush1.bf16.msra.mxu0 0
    %231 = vmatprep.subr.bf16.mxu0 0
    %232 = vmatpush1.bf16.msra.mxu0 0
    %233 = vmatprep.subr.bf16.mxu0 0
    %234 = vmatpush1.bf16.msra.mxu0 0
    %235 = vmatprep.subr.bf16.mxu0 0
    %236 = vmatpush1.bf16.msra.mxu0 0
    %237 = vmatprep.subr.bf16.mxu0 0
    %238 = vmatpush1.bf16.msra.mxu0 0
    %239 = vmatprep.subr.bf16.mxu0 0
    %240 = vmatpush1.bf16.msra.mxu0 0
    %241 = vmatprep.mubr.bf16.mxu0 0
    %242 = vmatmul.mubr.bf16.gmra.mrb[0].mxu0 %v137
    %v243 = vpop.f32.mrb[0].mxu0
    %v244 = vadd.f32 %v159, %v243
    %v245 = vpop.f32.mrb[0].mxu0
    %v246 = vpop.f32.mrb[0].mxu0
    %v247 = vpop.f32.mrb[0].mxu0
    %248 = vdwg.mxu0
    %249 = vst [vmem:[#allocation8] sm:$0xff] %v244
    // Predicated region
    $region34: #{tpu_custom_call.1} parent=1 // pred_check
      _
    $region35: #{tpu_custom_call.1} parent=1 // pred_check_branch
      %251 = sbr.rel (0) target = $region37
    $region36: #{tpu_custom_call.1} parent=1 // pred_region
      %s253 = ssub.s32 128, 128
      %254 = vsyncadd [#allocation4], %s253
      %s256 = sshll.u32 [#allocation8], 4
      %s257 = int_to_ptr.vmem [resolvable:$true] %s256
      %259 = dma.vmem_to_hbm [thread:$0]  %s257, 128, %s5, [#allocation4]
    $region37: #{tpu_custom_call.1} parent=1 // pred_fallthru
      _
    // Predicated region
    $region38: #{tpu_custom_call.1} parent=1 // pred_check
      _
    $region39: #{tpu_custom_call.1} parent=1 // pred_check_branch
      %261 = sbr.rel (0) target = $region41
    $region40: #{tpu_custom_call.1} parent=1 // pred_region
      %262 = dma.done [#allocation4], 128
    $region41: #{tpu_custom_call.1} parent=1 // pred_fallthru
      _
    %263 = vsyncpa [#allocation3], 1
    %264 = vsyncpa [#allocation6], 1
    %265 = vsyncpa [#allocation4], 1

</llo_original>
